<compile_context>
chip_gen: v6e
topology: v6e:2x2x1
jax: 0.10.0
libtpu: 0.0.40
codegen_flags: <defaults>
</compile_context>

<pallas_src>
import functools
import math

import jax
import jax.numpy as jnp
from jax.experimental import pallas as pl
from jax.experimental.pallas import tpu as pltpu


def _round_up(x: int, m: int) -> int:
    return (x + m - 1) // m * m


def _pick_tile_m(M: int) -> int:
    """Row-tile size: big tiles (~512-1024 rows) for HBM roofline, >=2 grid steps
    when possible (v7x has 2 TensorCores), minimal padded-row waste."""
    if M <= 16:
        return _round_up(max(M, 8), 8)
    if M <= 2048:
        return _round_up(pl.cdiv(M, 2), 8)          # exactly 2 grid steps
    candidates = (1024, 896, 768, 640, 512)
    return min(candidates, key=lambda t: (_round_up(M, t) - M, -t))


def _mlp_fused_kernel(*refs, num_layers: int):
    # refs = (x_ref, w0, b0, w1, b1, ..., w_{L-1}, b_{L-1}, o_ref)
    # x_ref: (TM, Kp) bf16; w_l: (Din_p, Dout_p) bf16; b_l: (1, Dout_p) f32;
    # o_ref: (TM, Op) in the caller's activation dtype.
    x_ref, o_ref = refs[0], refs[-1]
    h = x_ref[...]
    for layer in range(num_layers):                      # tiny, static unroll
        w_ref = refs[1 + 2 * layer]
        b_ref = refs[2 + 2 * layer]
        # bf16 MXU operands, f32 accumulation.
        y = jnp.dot(h, w_ref[...], preferred_element_type=jnp.float32)
        y = y + b_ref[...]                               # f32 epilogue
        if layer < num_layers - 1:
            y = jnp.maximum(y, 0.0).astype(w_ref.dtype)  # back to bf16 for next MXU pass
        h = y
    o_ref[...] = h.astype(o_ref.dtype)


def pack_mlp_params(weights, biases, param_dtype=jnp.bfloat16):
    """One-time (hoisted) per-layer lane-dense padding + dtype cast.

    weights[i]: (n_in, n_out) -> (round_up(n_in,128), round_up(n_out,128)) param_dtype
    biases[i]:  (n_out,)      -> (1, round_up(n_out,128)) f32 (bias add stays f32)
    Zero padding keeps padded lanes exactly zero through matmul/bias/ReLU.
    """
    w_pad, b_pad = [], []
    for w, b in zip(weights, biases):
        n_in, n_out = w.shape
        ip, op = _round_up(n_in, 128), _round_up(n_out, 128)
        w_pad.append(jnp.pad(w.astype(param_dtype), ((0, ip - n_in), (0, op - n_out))))
        b_pad.append(jnp.pad(b.astype(jnp.float32), (0, op - n_out))[None, :])
    return w_pad, b_pad


def mlp_forward_pallas(x, w_pad, b_pad, out_dim):
    """Fused MLP forward. x: (..., input_dim); w_pad/b_pad from pack_mlp_params."""
    lead_shape = x.shape[:-1]
    K = x.shape[-1]
    L = len(w_pad)
    Kp = w_pad[0].shape[0]
    Op = w_pad[-1].shape[1]
    compute_dtype = w_pad[0].dtype
    out_dtype = x.dtype

    x2d = x.reshape(-1, K)
    M = x2d.shape[0]
    if x2d.dtype != compute_dtype:
        x2d = x2d.astype(compute_dtype)

    TM = _pick_tile_m(M)
    M_pad = _round_up(M, TM)
    if (M_pad, Kp) != (M, K):                        # skip pad when already aligned
        x2d = jnp.pad(x2d, ((0, M_pad - M), (0, Kp - K)))

    grid = (M_pad // TM,)
    in_specs = [pl.BlockSpec((TM, Kp), lambda i: (i, 0))]
    args = [x2d]
    for w, b in zip(w_pad, b_pad):
        in_specs.append(pl.BlockSpec(w.shape, lambda i: (0, 0)))   # resident weight
        in_specs.append(pl.BlockSpec(b.shape, lambda i: (0, 0)))   # resident bias
        args.extend((w, b))
    out_specs = pl.BlockSpec((TM, Op), lambda i: (i, 0))

    comp_isz = jnp.dtype(compute_dtype).itemsize
    out_isz = jnp.dtype(out_dtype).itemsize
    param_bytes = sum(int(a.size) * a.dtype.itemsize for a in w_pad + b_pad)
    pmax = max(max(w.shape) for w in w_pad)

    flops = 2 * M_pad * sum(w.shape[0] * w.shape[1] for w in w_pad)
    bytes_accessed = M_pad * Kp * comp_isz + param_bytes + M_pad * Op * out_isz
    cost = pl.CostEstimate(flops=flops, transcendentals=0, bytes_accessed=bytes_accessed)

    # VMEM budget: double-buffered in/out tiles + (double-buffered) resident params
    # + live f32 intermediates, with slack.  Clamped to stay within all generations.
    budget = (2 * (TM * Kp * comp_isz + TM * Op * out_isz)
              + 2 * param_bytes + 4 * TM * pmax * 4 + (2 << 20))
    vmem_limit = max(32 << 20, min(int(budget), 64 << 20))

    out = pl.pallas_call(
        functools.partial(_mlp_fused_kernel, num_layers=L),
        out_shape=jax.ShapeDtypeStruct((M_pad, Op), out_dtype),
        grid_spec=pltpu.PrefetchScalarGridSpec(
            num_scalar_prefetch=0,
            grid=grid,
            in_specs=in_specs,
            out_specs=out_specs,
        ),
        compiler_params=pltpu.CompilerParams(
            dimension_semantics=("parallel",),
            vmem_limit_bytes=vmem_limit),
        cost_estimate=cost,
    )(*args)

    if (M_pad, Op) != (M, out_dim):                  # skip slice when already exact
        out = out[:M, :out_dim]
    return out.reshape(*lead_shape, out_dim)


class MLPPallas:
    """JAX/Pallas equivalent of trackformer's MLP (stack of Linear + ReLU)."""

    def __init__(self, input_dim, hidden_dim, output_dim, num_layers, key,
                 param_dtype=jnp.bfloat16):
        self.num_layers = num_layers
        self.output_dim = output_dim
        h = [hidden_dim] * (num_layers - 1)
        dims_in = [input_dim] + h
        dims_out = h + [output_dim]
        self.weights, self.biases = [], []
        for n_in, n_out in zip(dims_in, dims_out):
            key, kw, kb = jax.random.split(key, 3)
            # Mimic torch.nn.Linear default init (uniform +-1/sqrt(fan_in)).
            bound = 1.0 / float(n_in) ** 0.5
            self.weights.append(
                jax.random.uniform(kw, (n_in, n_out), jnp.float32, -bound, bound))
            self.biases.append(
                jax.random.uniform(kb, (n_out,), jnp.float32, -bound, bound))
        # Hoisted, one-time weight prep (per-layer natural padding + bf16 cast).
        self._w_pad, self._b_pad = pack_mlp_params(self.weights, self.biases, param_dtype)
        self._pmax = max(max(w.shape) for w in self._w_pad)

    def __call__(self, x, use_pallas=None):
        if use_pallas is None:
            m = math.prod(x.shape[:-1]) if x.shape[:-1] else 1
            # Tiny problems: a Pallas launch + pad/slice costs more than fused XLA.
            use_pallas = m * self._pmax >= 4096
        if not use_pallas:
            return self._forward_jnp(x)
        return mlp_forward_pallas(x, self._w_pad, self._b_pad, self.output_dim)

    def _forward_jnp(self, x):
        h = x
        for i, (w, b) in enumerate(zip(self.weights, self.biases)):
            h = h @ w + b
            if i < self.num_layers - 1:
                h = jnp.maximum(h, 0.0)
        return h

    def reference_bf16(self, x):
        """Pure-jnp reference mirroring the kernel numerics (bf16 MXU, f32 acc)."""
        lead = x.shape[:-1]
        h = x.reshape(-1, x.shape[-1]).astype(jnp.bfloat16)
        for i, (w, b) in enumerate(zip(self.weights, self.biases)):
            y = jnp.dot(h, w.astype(jnp.bfloat16),
                        preferred_element_type=jnp.float32) + b.astype(jnp.float32)
            if i < self.num_layers - 1:
                y = jnp.maximum(y, 0.0).astype(jnp.bfloat16)
            h = y
        return h.astype(x.dtype).reshape(*lead, self.output_dim)


if __name__ == "__main__":
    key = jax.random.PRNGKey(0)
    key, kx = jax.random.split(key)

    # DETR bbox-head shapes: num_layers=3, input_dim=hidden_dim=256, output_dim=4;
    # x is (batch=2, queries=100, 256)  ->  M=200 rows, 2 parallel grid steps.
    batch, queries = 2, 100
    input_dim, hidden_dim, output_dim, num_layers = 256, 256, 4, 3

    x = jax.random.normal(kx, (batch, queries, input_dim), jnp.float32)

    mlp = MLPPallas(input_dim, hidden_dim, output_dim, num_layers, key)
    out = mlp(x, use_pallas=True)
    jax.block_until_ready(out)

    assert out.shape == (batch, queries, output_dim)

    # Primary check: against a reference with identical numerics (bf16 operands,
    # f32 accumulation) -> should match tightly.
    ref = mlp.reference_bf16(x)
    assert jnp.allclose(out, ref, atol=1e-3, rtol=1e-3), \
        float(jnp.max(jnp.abs(out - ref)))

    # Secondary sanity check: against the exact f32 MLP semantics (bf16 MXU inputs
    # introduce ~1% relative error, hence the loose tolerance).
    ref_f32 = mlp._forward_jnp(x)
    assert jnp.allclose(out, ref_f32, atol=1e-1, rtol=1e-1)

    print("KERNEL_OK")
</pallas_src>

<mosaic_0001>
module attributes {stable_mosaic.version = 11 : i64} {
  func.func @_mlp_fused_kernel(%arg0: i32, %arg1: memref<104x256xbf16, #tpu.memory_space<vmem>>, %arg2: memref<256x256xbf16, #tpu.memory_space<vmem>>, %arg3: memref<1x256xf32, #tpu.memory_space<vmem>>, %arg4: memref<256x256xbf16, #tpu.memory_space<vmem>>, %arg5: memref<1x256xf32, #tpu.memory_space<vmem>>, %arg6: memref<256x128xbf16, #tpu.memory_space<vmem>>, %arg7: memref<1x128xf32, #tpu.memory_space<vmem>>, %arg8: memref<104x128xf32, #tpu.memory_space<vmem>>) attributes {dimension_semantics = [#tpu.dimension_semantics<parallel>], iteration_bounds = array<i64: 2>, scalar_prefetch = 0 : i64, scratch_operands = 0 : i64, tpu.core_type = #tpu.core_type<tc>, window_params = [{transform_indices = @transform_0, window_bounds = array<i64: 104, 256>}, {pipeline_mode = #tpu.pipeline_mode<synchronous>, transform_indices = @transform_1, window_bounds = array<i64: 256, 256>}, {pipeline_mode = #tpu.pipeline_mode<synchronous>, transform_indices = @transform_2, window_bounds = array<i64: 1, 256>}, {pipeline_mode = #tpu.pipeline_mode<synchronous>, transform_indices = @transform_3, window_bounds = array<i64: 256, 256>}, {pipeline_mode = #tpu.pipeline_mode<synchronous>, transform_indices = @transform_4, window_bounds = array<i64: 1, 256>}, {pipeline_mode = #tpu.pipeline_mode<synchronous>, transform_indices = @transform_5, window_bounds = array<i64: 256, 128>}, {pipeline_mode = #tpu.pipeline_mode<synchronous>, transform_indices = @transform_6, window_bounds = array<i64: 1, 128>}, {transform_indices = @transform_7, window_bounds = array<i64: 104, 128>}]} {
    %c0 = arith.constant 0 : index
    %c0_0 = arith.constant 0 : index
    %0 = vector.load %arg1[%c0, %c0_0] : memref<104x256xbf16, #tpu.memory_space<vmem>>, vector<104x256xbf16>
    %c0_1 = arith.constant 0 : index
    %c0_2 = arith.constant 0 : index
    %1 = vector.load %arg2[%c0_1, %c0_2] : memref<256x256xbf16, #tpu.memory_space<vmem>>, vector<256x256xbf16>
    %cst = arith.constant dense<0.000000e+00> : vector<104x256xf32>
    %2 = tpu.matmul %0, %1, %cst {dimension_numbers = #tpu.dot_dimension_numbers<[1], [0], [0], [1], [0, 0, 1, 1], [], []>} : vector<104x256xbf16>, vector<256x256xbf16>, vector<104x256xf32> -> vector<104x256xf32>
    %c0_3 = arith.constant 0 : index
    %c0_4 = arith.constant 0 : index
    %3 = vector.load %arg3[%c0_3, %c0_4] : memref<1x256xf32, #tpu.memory_space<vmem>>, vector<1x256xf32>
    %4 = vector.broadcast %3 : vector<1x256xf32> to vector<104x256xf32>
    %5 = arith.addf %2, %4 : vector<104x256xf32>
    %cst_5 = arith.constant 0.000000e+00 : f32
    %6 = vector.broadcast %cst_5 : f32 to vector<104x256xf32>
    %7 = arith.maximumf %5, %6 : vector<104x256xf32>
    %8 = arith.truncf %7 : vector<104x256xf32> to vector<104x256xbf16>
    %c0_6 = arith.constant 0 : index
    %c0_7 = arith.constant 0 : index
    %9 = vector.load %arg4[%c0_6, %c0_7] : memref<256x256xbf16, #tpu.memory_space<vmem>>, vector<256x256xbf16>
    %cst_8 = arith.constant dense<0.000000e+00> : vector<104x256xf32>
    %10 = tpu.matmul %8, %9, %cst_8 {dimension_numbers = #tpu.dot_dimension_numbers<[1], [0], [0], [1], [0, 0, 1, 1], [], []>} : vector<104x256xbf16>, vector<256x256xbf16>, vector<104x256xf32> -> vector<104x256xf32>
    %c0_9 = arith.constant 0 : index
    %c0_10 = arith.constant 0 : index
    %11 = vector.load %arg5[%c0_9, %c0_10] : memref<1x256xf32, #tpu.memory_space<vmem>>, vector<1x256xf32>
    %12 = vector.broadcast %11 : vector<1x256xf32> to vector<104x256xf32>
    %13 = arith.addf %10, %12 : vector<104x256xf32>
    %cst_11 = arith.constant 0.000000e+00 : f32
    %14 = vector.broadcast %cst_11 : f32 to vector<104x256xf32>
    %15 = arith.maximumf %13, %14 : vector<104x256xf32>
    %16 = arith.truncf %15 : vector<104x256xf32> to vector<104x256xbf16>
    %c0_12 = arith.constant 0 : index
    %c0_13 = arith.constant 0 : index
    %17 = vector.load %arg6[%c0_12, %c0_13] : memref<256x128xbf16, #tpu.memory_space<vmem>>, vector<256x128xbf16>
    %cst_14 = arith.constant dense<0.000000e+00> : vector<104x128xf32>
    %18 = tpu.matmul %16, %17, %cst_14 {dimension_numbers = #tpu.dot_dimension_numbers<[1], [0], [0], [1], [0, 0, 1, 1], [], []>} : vector<104x256xbf16>, vector<256x128xbf16>, vector<104x128xf32> -> vector<104x128xf32>
    %c0_15 = arith.constant 0 : index
    %c0_16 = arith.constant 0 : index
    %19 = vector.load %arg7[%c0_15, %c0_16] : memref<1x128xf32, #tpu.memory_space<vmem>>, vector<1x128xf32>
    %20 = vector.broadcast %19 : vector<1x128xf32> to vector<104x128xf32>
    %21 = arith.addf %18, %20 : vector<104x128xf32>
    %c0_17 = arith.constant 0 : index
    %c0_18 = arith.constant 0 : index
    %22 = vector.load %arg8[%c0_17, %c0_18] : memref<104x128xf32, #tpu.memory_space<vmem>>, vector<104x128xf32>
    tpu.vector_store %arg8[%c0_17, %c0_18], %21 {strides = array<i32>} : memref<104x128xf32, #tpu.memory_space<vmem>>, vector<104x128xf32>,
    return
  }
  func.func @transform_0(%arg0: i32) -> (i32, i32) {
    %c0_i32 = arith.constant 0 : i32
    %c0_i32_0 = arith.constant 0 : i32
    return %arg0, %c0_i32 : i32, i32
  }
  func.func @transform_1(%arg0: i32) -> (i32, i32) {
    %c0_i32 = arith.constant 0 : i32
    %c0_i32_0 = arith.constant 0 : i32
    %c0_i32_1 = arith.constant 0 : i32
    return %c0_i32, %c0_i32_0 : i32, i32
  }
  func.func @transform_2(%arg0: i32) -> (i32, i32) {
    %c0_i32 = arith.constant 0 : i32
    %c0_i32_0 = arith.constant 0 : i32
    %c0_i32_1 = arith.constant 0 : i32
    return %c0_i32, %c0_i32_0 : i32, i32
  }
  func.func @transform_3(%arg0: i32) -> (i32, i32) {
    %c0_i32 = arith.constant 0 : i32
    %c0_i32_0 = arith.constant 0 : i32
    %c0_i32_1 = arith.constant 0 : i32
    return %c0_i32, %c0_i32_0 : i32, i32
  }
  func.func @transform_4(%arg0: i32) -> (i32, i32) {
    %c0_i32 = arith.constant 0 : i32
    %c0_i32_0 = arith.constant 0 : i32
    %c0_i32_1 = arith.constant 0 : i32
    return %c0_i32, %c0_i32_0 : i32, i32
  }
  func.func @transform_5(%arg0: i32) -> (i32, i32) {
    %c0_i32 = arith.constant 0 : i32
    %c0_i32_0 = arith.constant 0 : i32
    %c0_i32_1 = arith.constant 0 : i32
    return %c0_i32, %c0_i32_0 : i32, i32
  }
  func.func @transform_6(%arg0: i32) -> (i32, i32) {
    %c0_i32 = arith.constant 0 : i32
    %c0_i32_0 = arith.constant 0 : i32
    %c0_i32_1 = arith.constant 0 : i32
    return %c0_i32, %c0_i32_0 : i32, i32
  }
  func.func @transform_7(%arg0: i32) -> (i32, i32) {
    %c0_i32 = arith.constant 0 : i32
    %c0_i32_0 = arith.constant 0 : i32
    return %arg0, %c0_i32 : i32, i32
  }
}

</mosaic_0001>

<llo_original>
// kernel: tpu_custom_call.1
$region0: #{tpu_custom_call.1}
  #allocation0 [shape = 'u32[]', space=smem, size = 0x4, offset = 0x4, fixed_abs, tag = 'smem constant byte address 0x4 - core index']
  #allocation1 [shape = 'u32[144,128]{1,0:T(1,128)}', space=vmem, size = 0x12000, scoped, tag = 'internal scratch']
  %s0 = inlined_call_operand.hbm [shape: bf16[208,256], index: 0, kind: input, shape index: {}]
  %s1 = inlined_call_operand.hbm [shape: bf16[256,256], index: 1, kind: input, shape index: {}]
  %s2 = inlined_call_operand.vmem [shape: f32[1,256], index: 2, kind: input, shape index: {}]
  %s3 = inlined_call_operand.hbm [shape: bf16[256,256], index: 3, kind: input, shape index: {}]
  %s4 = inlined_call_operand.vmem [shape: f32[1,256], index: 4, kind: input, shape index: {}]
  %s5 = inlined_call_operand.hbm [shape: bf16[256,128], index: 5, kind: input, shape index: {}]
  %s6 = inlined_call_operand.vmem [shape: f32[1,128], index: 6, kind: input, shape index: {}]
  %s7 = inlined_call_operand.hbm [shape: f32[208,128], index: 7, kind: output, shape index: {}]
  %s8 = sld [smem:[#allocation0]]
  $region77: #{tpu_custom_call.1} parent=0
    _
  %s10 = ssub.s32 1, %s8
  %s11 = scalar_select 0, %s10, %s8
  $region1: #{tpu_custom_call.1} parent=0
    #allocation2 [shape = 'u8[106496]{0}', space=vmem, size = 0x1a000, scoped, tag = 'input window, operand 0']
    #allocation3 [shape = 's32[2]{0}', space=sflag, size = 0x8, scoped, tag = 'scoped memory for tpu_custom_call.1']
    #allocation4 [shape = 's32[2]{0}', space=sflag, size = 0x8, scoped, tag = 'scoped memory for tpu_custom_call.1']
    #allocation5 [shape = 'u8[131072]{0}', space=vmem, size = 0x20000, scoped, tag = 'input window, operand 1, single buffered']
    #allocation6 [shape = 's32[1]{0}', space=sflag, size = 0x4, scoped, tag = 'scoped memory for tpu_custom_call.1']
    #allocation7 [shape = 'u8[131072]{0}', space=vmem, size = 0x20000, scoped, tag = 'input window, operand 3, single buffered']
    #allocation8 [shape = 'u8[65536]{0}', space=vmem, size = 0x10000, scoped, tag = 'input window, operand 5, single buffered']
    #allocation9 [shape = 's32[1]{0}', space=sflag, size = 0x4, scoped, tag = 'scoped memory for tpu_custom_call.1']
    #allocation10 [shape = 'u8[106496]{0}', space=vmem, size = 0x1a000, scoped, tag = 'output window, operand 0']
    %12 = vsyncpa [#allocation3], 0
    %s13 = scalar_lea.sflag [#allocation3], 1
    %14 = vsyncpa %s13, 0
    %15 = vsyncpa [#allocation6], 0
    %16 = vsyncpa [#allocation9], 0
    %17 = vsyncpa [#allocation4], 0
    %s18 = scalar_lea.sflag [#allocation4], 1
    %19 = vsyncpa %s18, 0
    loop: start=0, step=1, limit=4
    $region2: #{tpu_custom_call.1} parent=1 // loop_pre_header
      _
    $region3: #{tpu_custom_call.1} parent=1 // loop_header
      %s21 = sphi 0, %s25
      %p22 = scmp.ge.s32.totalorder %s21, 4
      %s31 = sphi 0, %s33
      %s34 = sphi 0, %s31
      %s35 = sphi 0, %s34
      %s51 = sphi 0, %s35
      %s55 = sphi 0, %s55
      %s57 = sphi 0, %s55
      %s58 = sphi 0, %s57
      %s72 = sphi 0, %s58
      %s76 = sphi 0, %s76
      %s78 = sphi 0, %s76
      %s79 = sphi 0, %s78
      %s93 = sphi 0, %s79
      %s97 = sphi 0, %s97
      %s99 = sphi 0, %s97
      %s100 = sphi 0, %s99
      %s114 = sphi 0, %s100
      %s118 = sphi 0, %s118
      %s120 = sphi 0, %s118
      %s121 = sphi 0, %s120
      %s135 = sphi 0, %s121
      %s139 = sphi 0, %s139
      %s141 = sphi 0, %s139
      %s142 = sphi 0, %s141
      %s156 = sphi 0, %s142
      %s160 = sphi 0, %s160
      %s162 = sphi 0, %s160
      %s163 = sphi 0, %s162
      %s177 = sphi 0, %s163
      %s183 = sphi 0, %s185
      %s186 = sphi 0, %s183
      %s187 = sphi 0, %s186
      %s203 = sphi 0, %s187
    $region4: #{tpu_custom_call.1} parent=1 // loop_header_branch
      %24 = sbr.rel (%p22) target = $region8
    $region5: #{tpu_custom_call.1} parent=1 // loop_body
      %s26 = ssub.s32 %s21, 1
      %s27 = ssub.s32 %s21, 2
      %s28 = sadd.s32 %s21, 1
      %s29 = ssub.s32 %s21, %s28
      %p30 = scmp.eq.s32.totalorder %s29, 0
      %s32 = sadd.s32 %s31, 1
      %s33 = scalar_select %p30, %s31, %s32
      %p36 = pneg %p30
      %p37 = scmp.eq.s32.totalorder %s21, 1
      %p38 = por %p36, %p37
      %p39 = scmp.ne.s32.totalorder %s31, %s34
      %p40 = scmp.eq.s32.totalorder %s21, 0
      %p41 = por %p39, %p40
      %p42 = scmp.ne.s32.totalorder %s31, %s34
      %p43 = scmp.eq.s32.totalorder %s26, 1
      %p44 = por %p42, %p43
      %p45 = scmp.ne.s32.totalorder %s34, %s35
      %p46 = scmp.eq.s32.totalorder %s26, 0
      %p47 = por %p45, %p46
      %p48 = scmp.ne.s32.totalorder %s34, %s35
      %p49 = scmp.eq.s32.totalorder %s27, 1
      %p50 = por %p48, %p49
      %p52 = scmp.ne.s32.totalorder %s35, %s51
      %p53 = scmp.eq.s32.totalorder %s27, 0
      %p54 = por %p52, %p53
      %s56 = sadd.s32 %s55, 1
      %p59 = scmp.eq.s32.totalorder %s21, 1
      %p60 = scmp.ne.s32.totalorder %s55, %s57
      %p61 = scmp.eq.s32.totalorder %s21, 0
      %p62 = por %p60, %p61
      %p63 = scmp.ne.s32.totalorder %s55, %s57
      %p64 = scmp.eq.s32.totalorder %s26, 1
      %p65 = por %p63, %p64
      %p66 = scmp.ne.s32.totalorder %s57, %s58
      %p67 = scmp.eq.s32.totalorder %s26, 0
      %p68 = por %p66, %p67
      %p69 = scmp.ne.s32.totalorder %s57, %s58
      %p70 = scmp.eq.s32.totalorder %s27, 1
      %p71 = por %p69, %p70
      %p73 = scmp.ne.s32.totalorder %s58, %s72
      %p74 = scmp.eq.s32.totalorder %s27, 0
      %p75 = por %p73, %p74
      %s77 = sadd.s32 %s76, 1
      %p80 = scmp.eq.s32.totalorder %s21, 1
      %p81 = scmp.ne.s32.totalorder %s76, %s78
      %p82 = scmp.eq.s32.totalorder %s21, 0
      %p83 = por %p81, %p82
      %p84 = scmp.ne.s32.totalorder %s76, %s78
      %p85 = scmp.eq.s32.totalorder %s26, 1
      %p86 = por %p84, %p85
      %p87 = scmp.ne.s32.totalorder %s78, %s79
      %p88 = scmp.eq.s32.totalorder %s26, 0
      %p89 = por %p87, %p88
      %p90 = scmp.ne.s32.totalorder %s78, %s79
      %p91 = scmp.eq.s32.totalorder %s27, 1
      %p92 = por %p90, %p91
      %p94 = scmp.ne.s32.totalorder %s79, %s93
      %p95 = scmp.eq.s32.totalorder %s27, 0
      %p96 = por %p94, %p95
      %s98 = sadd.s32 %s97, 1
      %p101 = scmp.eq.s32.totalorder %s21, 1
      %p102 = scmp.ne.s32.totalorder %s97, %s99
      %p103 = scmp.eq.s32.totalorder %s21, 0
      %p104 = por %p102, %p103
      %p105 = scmp.ne.s32.totalorder %s97, %s99
      %p106 = scmp.eq.s32.totalorder %s26, 1
      %p107 = por %p105, %p106
      %p108 = scmp.ne.s32.totalorder %s99, %s100
      %p109 = scmp.eq.s32.totalorder %s26, 0
      %p110 = por %p108, %p109
      %p111 = scmp.ne.s32.totalorder %s99, %s100
      %p112 = scmp.eq.s32.totalorder %s27, 1
      %p113 = por %p111, %p112
      %p115 = scmp.ne.s32.totalorder %s100, %s114
      %p116 = scmp.eq.s32.totalorder %s27, 0
      %p117 = por %p115, %p116
      %s119 = sadd.s32 %s118, 1
      %p122 = scmp.eq.s32.totalorder %s21, 1
      %p123 = scmp.ne.s32.totalorder %s118, %s120
      %p124 = scmp.eq.s32.totalorder %s21, 0
      %p125 = por %p123, %p124
      %p126 = scmp.ne.s32.totalorder %s118, %s120
      %p127 = scmp.eq.s32.totalorder %s26, 1
      %p128 = por %p126, %p127
      %p129 = scmp.ne.s32.totalorder %s120, %s121
      %p130 = scmp.eq.s32.totalorder %s26, 0
      %p131 = por %p129, %p130
      %p132 = scmp.ne.s32.totalorder %s120, %s121
      %p133 = scmp.eq.s32.totalorder %s27, 1
      %p134 = por %p132, %p133
      %p136 = scmp.ne.s32.totalorder %s121, %s135
      %p137 = scmp.eq.s32.totalorder %s27, 0
      %p138 = por %p136, %p137
      %s140 = sadd.s32 %s139, 1
      %p143 = scmp.eq.s32.totalorder %s21, 1
      %p144 = scmp.ne.s32.totalorder %s139, %s141
      %p145 = scmp.eq.s32.totalorder %s21, 0
      %p146 = por %p144, %p145
      %p147 = scmp.ne.s32.totalorder %s139, %s141
      %p148 = scmp.eq.s32.totalorder %s26, 1
      %p149 = por %p147, %p148
      %p150 = scmp.ne.s32.totalorder %s141, %s142
      %p151 = scmp.eq.s32.totalorder %s26, 0
      %p152 = por %p150, %p151
      %p153 = scmp.ne.s32.totalorder %s141, %s142
      %p154 = scmp.eq.s32.totalorder %s27, 1
      %p155 = por %p153, %p154
      %p157 = scmp.ne.s32.totalorder %s142, %s156
      %p158 = scmp.eq.s32.totalorder %s27, 0
      %p159 = por %p157, %p158
      %s161 = sadd.s32 %s160, 1
      %p164 = scmp.eq.s32.totalorder %s21, 1
      %p165 = scmp.ne.s32.totalorder %s160, %s162
      %p166 = scmp.eq.s32.totalorder %s21, 0
      %p167 = por %p165, %p166
      %p168 = scmp.ne.s32.totalorder %s160, %s162
      %p169 = scmp.eq.s32.totalorder %s26, 1
      %p170 = por %p168, %p169
      %p171 = scmp.ne.s32.totalorder %s162, %s163
      %p172 = scmp.eq.s32.totalorder %s26, 0
      %p173 = por %p171, %p172
      %p174 = scmp.ne.s32.totalorder %s162, %s163
      %p175 = scmp.eq.s32.totalorder %s27, 1
      %p176 = por %p174, %p175
      %p178 = scmp.ne.s32.totalorder %s163, %s177
      %p179 = scmp.eq.s32.totalorder %s27, 0
      %p180 = por %p178, %p179
      %s181 = ssub.s32 %s21, %s28
      %p182 = scmp.eq.s32.totalorder %s181, 0
      %s184 = sadd.s32 %s183, 1
      %s185 = scalar_select %p182, %s183, %s184
      %p188 = pneg %p182
      %p189 = scmp.eq.s32.totalorder %s21, 1
      %p190 = por %p188, %p189
      %p191 = scmp.ne.s32.totalorder %s183, %s186
      %p192 = scmp.eq.s32.totalorder %s21, 0
      %p193 = por %p191, %p192
      %p194 = scmp.ne.s32.totalorder %s183, %s186
      %p195 = scmp.eq.s32.totalorder %s26, 1
      %p196 = por %p194, %p195
      %p197 = scmp.ne.s32.totalorder %s186, %s187
      %p198 = scmp.eq.s32.totalorder %s26, 0
      %p199 = por %p197, %p198
      %p200 = scmp.ne.s32.totalorder %s186, %s187
      %p201 = scmp.eq.s32.totalorder %s27, 1
      %p202 = por %p200, %p201
      %p204 = scmp.ne.s32.totalorder %s187, %s203
      %p205 = scmp.eq.s32.totalorder %s27, 0
      %p206 = por %p204, %p205
      %p207 = scmp.le.s32.totalorder 1, %s21
      %p208 = scmp.lt.s32.totalorder %s21, 3
      %p209 = pnand %p207, %p208
      %p210 = pneg %p209
      // Predicated region
      $region9: #{tpu_custom_call.1} parent=5 // pred_check
        _
      $region10: #{tpu_custom_call.1} parent=5 // pred_check_branch
        %212 = sbr.rel (%p209) target = $region12
      $region11: #{tpu_custom_call.1} parent=5 // pred_region
        %s213 = ssub.s32 %s21, 1
        // Predicated region
        $region13: #{tpu_custom_call.1} parent=11 // pred_check
          %p214 = pneg %p68
        $region14: #{tpu_custom_call.1} parent=11 // pred_check_branch
          %216 = sbr.rel (%p214) target = $region16
        $region15: #{tpu_custom_call.1} parent=11 // pred_region
          %s218 = ssub.s32 4096, 4096
          %219 = vsyncadd [#allocation6], %s218
          %s220 = sshll.u32 [#allocation5], 4
          %s221 = int_to_ptr.vmem [resolvable:$true] %s220
          %226 = dma.hbm_to_vmem [thread:$0]  %s1, 4096, %s221, [#allocation6], 128, 128, 8
        $region16: #{tpu_custom_call.1} parent=11 // pred_fallthru
          _
        // Predicated region
        $region17: #{tpu_custom_call.1} parent=11 // pred_check
          %p227 = pneg %p89
        $region18: #{tpu_custom_call.1} parent=11 // pred_check_branch
          %229 = sbr.rel (%p227) target = $region20
        $region19: #{tpu_custom_call.1} parent=11 // pred_region
          _
        $region20: #{tpu_custom_call.1} parent=11 // pred_fallthru
          _
        // Predicated region
        $region21: #{tpu_custom_call.1} parent=11 // pred_check
          %p230 = pneg %p110
        $region22: #{tpu_custom_call.1} parent=11 // pred_check_branch
          %232 = sbr.rel (%p230) target = $region24
        $region23: #{tpu_custom_call.1} parent=11 // pred_region
          %s234 = ssub.s32 4096, 4096
          %235 = vsyncadd [#allocation6], %s234
          %s236 = sshll.u32 [#allocation7], 4
          %s237 = int_to_ptr.vmem [resolvable:$true] %s236
          %242 = dma.hbm_to_vmem [thread:$0]  %s3, 4096, %s237, [#allocation6], 128, 128, 8
        $region24: #{tpu_custom_call.1} parent=11 // pred_fallthru
          _
        // Predicated region
        $region25: #{tpu_custom_call.1} parent=11 // pred_check
          %p243 = pneg %p131
        $region26: #{tpu_custom_call.1} parent=11 // pred_check_branch
          %245 = sbr.rel (%p243) target = $region28
        $region27: #{tpu_custom_call.1} parent=11 // pred_region
          _
        $region28: #{tpu_custom_call.1} parent=11 // pred_fallthru
          _
        // Predicated region
        $region29: #{tpu_custom_call.1} parent=11 // pred_check
          %p246 = pneg %p152
        $region30: #{tpu_custom_call.1} parent=11 // pred_check_branch
          %248 = sbr.rel (%p246) target = $region32
        $region31: #{tpu_custom_call.1} parent=11 // pred_region
          %s250 = ssub.s32 2048, 2048
          %251 = vsyncadd [#allocation9], %s250
          %s252 = sshll.u32 [#allocation8], 4
          %s253 = int_to_ptr.vmem [resolvable:$true] %s252
          %258 = dma.hbm_to_vmem [thread:$0]  %s5, 2048, %s253, [#allocation9], 64, 64, 4
        $region32: #{tpu_custom_call.1} parent=11 // pred_fallthru
          _
        // Predicated region
        $region33: #{tpu_custom_call.1} parent=11 // pred_check
          %p259 = pneg %p173
        $region34: #{tpu_custom_call.1} parent=11 // pred_check_branch
          %261 = sbr.rel (%p259) target = $region36
        $region35: #{tpu_custom_call.1} parent=11 // pred_region
          _
        $region36: #{tpu_custom_call.1} parent=11 // pred_fallthru
          _
      $region12: #{tpu_custom_call.1} parent=5 // pred_fallthru
        _
      %p262 = scmp.lt.s32.totalorder %s21, 2
      // Predicated region
      $region37: #{tpu_custom_call.1} parent=5 // pred_check
        %p263 = pneg %p262
      $region38: #{tpu_custom_call.1} parent=5 // pred_check_branch
        %265 = sbr.rel (%p263) target = $region40
      $region39: #{tpu_custom_call.1} parent=5 // pred_region
        // Predicated region
        $region41: #{tpu_custom_call.1} parent=39 // pred_check
          %p266 = pneg %p41
        $region42: #{tpu_custom_call.1} parent=39 // pred_check_branch
          %268 = sbr.rel (%p266) target = $region44
        $region43: #{tpu_custom_call.1} parent=39 // pred_region
          %s269 = sand.u32 %s31, 1
          %s270 = scalar_lea.sflag [#allocation3], %s269
          %s271 = sand.u32 %s31, 1
          %s272 = smul.addr %s271, 104
          %s273 = scalar_lea.vmem [#allocation2], %s272
          %s274 = smul.u32 13, %s21
          %s276 = ssub.s32 1664, 1664
          %277 = vsyncadd %s270, %s276
          %s278 = smul.addr %s274, 2
          %s279 = smul.addr %s278, 64
          %s280 = scalar_lea.hbm %s0, %s279
          %s281 = sshll.u32 %s273, 4
          %s282 = int_to_ptr.vmem [resolvable:$true] %s281
          %287 = dma.hbm_to_vmem [thread:$0]  %s280, 1664, %s282, %s270, 128, 128, 8
        $region44: #{tpu_custom_call.1} parent=39 // pred_fallthru
          _
      $region40: #{tpu_custom_call.1} parent=5 // pred_fallthru
        _
      %p288 = scmp.le.s32.totalorder 1, %s21
      %p289 = scmp.lt.s32.totalorder %s21, 3
      %p290 = pnand %p288, %p289
      %p291 = pneg %p290
      // Predicated region
      $region45: #{tpu_custom_call.1} parent=5 // pred_check
        _
      $region46: #{tpu_custom_call.1} parent=5 // pred_check_branch
        %293 = sbr.rel (%p290) target = $region48
      $region47: #{tpu_custom_call.1} parent=5 // pred_region
        %s294 = ssub.s32 %s21, 1
        %s295 = sand.u32 %s34, 1
        %s296 = scalar_lea.sflag [#allocation3], %s295
        %s297 = sand.u32 %s34, 1
        %s298 = smul.addr %s297, 104
        %s299 = scalar_lea.vmem [#allocation2], %s298
        // Predicated region
        $region49: #{tpu_custom_call.1} parent=47 // pred_check
          %p300 = pneg %p47
        $region50: #{tpu_custom_call.1} parent=47 // pred_check_branch
          %302 = sbr.rel (%p300) target = $region52
        $region51: #{tpu_custom_call.1} parent=47 // pred_region
          %303 = dma.done %s296, 1664
        $region52: #{tpu_custom_call.1} parent=47 // pred_fallthru
          _
        // Predicated region
        $region53: #{tpu_custom_call.1} parent=47 // pred_check
          %p304 = pneg %p68
        $region54: #{tpu_custom_call.1} parent=47 // pred_check_branch
          %306 = sbr.rel (%p304) target = $region56
        $region55: #{tpu_custom_call.1} parent=47 // pred_region
          %307 = dma.done [#allocation6], 4096
        $region56: #{tpu_custom_call.1} parent=47 // pred_fallthru
          _
        // Predicated region
        $region57: #{tpu_custom_call.1} parent=47 // pred_check
          %p308 = pneg %p110
        $region58: #{tpu_custom_call.1} parent=47 // pred_check_branch
          %310 = sbr.rel (%p308) target = $region60
        $region59: #{tpu_custom_call.1} parent=47 // pred_region
          %311 = dma.done [#allocation6], 4096
        $region60: #{tpu_custom_call.1} parent=47 // pred_fallthru
          _
        // Predicated region
        $region61: #{tpu_custom_call.1} parent=47 // pred_check
          %p312 = pneg %p152
        $region62: #{tpu_custom_call.1} parent=47 // pred_check_branch
          %314 = sbr.rel (%p312) target = $region64
        $region63: #{tpu_custom_call.1} parent=47 // pred_region
          %315 = dma.done [#allocation9], 2048
        $region64: #{tpu_custom_call.1} parent=47 // pred_fallthru
          _
        %s316 = sand.u32 %s34, 1
        %s317 = scalar_lea.sflag [#allocation3], %s316
        %s318 = sand.u32 %s34, 1
        %s319 = smul.addr %s318, 104
        %s320 = scalar_lea.vmem [#allocation2], %s319
        %p321 = pneg %p47
        %p322 = pneg %p44
        %p323 = pneg %p68
        %p324 = pneg %p65
        %p325 = pneg %p89
        %p326 = pneg %p86
        %p327 = pneg %p110
        %p328 = pneg %p107
        %p329 = pneg %p131
        %p330 = pneg %p128
        %p331 = pneg %p152
        %p332 = pneg %p149
        %p333 = pneg %p173
        %p334 = pneg %p170
        %p335 = pneg %p199
        %p336 = pneg %p196
        %s337 = sand.u32 %s186, 1
        %s338 = scalar_lea.sflag [#allocation4], %s337
        %s339 = sand.u32 %s186, 1
        %s340 = smul.addr %s339, 104
        %s341 = scalar_lea.vmem [#allocation10], %s340
        %s342 = smul.u32 13, %s26
        %s343 = smul.u32 13, %s26
        %v345 = vld [vmem:[%s299] sm:$0xff]
        %v346 = vld [vmem:[%s299 + $0x8] sm:$0xff]
        %v347 = vld [vmem:[%s299 + $0x10] sm:$0xff]
        %v348 = vld [vmem:[%s299 + $0x18] sm:$0xff]
        %v349 = vld [vmem:[%s299 + $0x20] sm:$0xff]
        %v350 = vld [vmem:[%s299 + $0x28] sm:$0xff]
        %v351 = vld [vmem:[%s299 + $0x30] sm:$0xff]
        %v352 = vld [vmem:[%s299 + $0x38] sm:$0xff]
        %v353 = vld [vmem:[%s299 + $0x40] sm:$0xff]
        %v354 = vld [vmem:[%s299 + $0x48] sm:$0xff]
        %v355 = vld [vmem:[%s299 + $0x50] sm:$0xff]
        %v356 = vld [vmem:[%s299 + $0x58] sm:$0xff]
        %v357 = vld [vmem:[%s299 + $0x60] sm:$0xff]
        %v358 = vld [vmem:[#allocation5] sm:$0xff]
        %v359 = vld [vmem:[#allocation5 + $0x8] sm:$0xff]
        %v360 = vld [vmem:[#allocation5 + $0x10] sm:$0xff]
        %v361 = vld [vmem:[#allocation5 + $0x18] sm:$0xff]
        %v362 = vld [vmem:[#allocation5 + $0x20] sm:$0xff]
        %v363 = vld [vmem:[#allocation5 + $0x28] sm:$0xff]
        %v364 = vld [vmem:[#allocation5 + $0x30] sm:$0xff]
        %v365 = vld [vmem:[#allocation5 + $0x38] sm:$0xff]
        %v366 = vld [vmem:[#allocation5 + $0x40] sm:$0xff]
        %v367 = vld [vmem:[#allocation5 + $0x48] sm:$0xff]
        %v368 = vld [vmem:[#allocation5 + $0x50] sm:$0xff]
        %v369 = vld [vmem:[#allocation5 + $0x58] sm:$0xff]
        %v370 = vld [vmem:[#allocation5 + $0x60] sm:$0xff]
        %v371 = vld [vmem:[#allocation5 + $0x68] sm:$0xff]
        %v372 = vld [vmem:[#allocation5 + $0x70] sm:$0xff]
        %v373 = vld [vmem:[#allocation5 + $0x78] sm:$0xff]
        %v374 = vld [vmem:[#allocation5 + $0x80] sm:$0xff]
        %v375 = vld [vmem:[#allocation5 + $0x88] sm:$0xff]
        %v376 = vld [vmem:[#allocation5 + $0x90] sm:$0xff]
        %v377 = vld [vmem:[#allocation5 + $0x98] sm:$0xff]
        %v378 = vld [vmem:[#allocation5 + $0xa0] sm:$0xff]
        %v379 = vld [vmem:[#allocation5 + $0xa8] sm:$0xff]
        %v380 = vld [vmem:[#allocation5 + $0xb0] sm:$0xff]
        %v381 = vld [vmem:[#allocation5 + $0xb8] sm:$0xff]
        %v382 = vld [vmem:[#allocation5 + $0xc0] sm:$0xff]
        %v383 = vld [vmem:[#allocation5 + $0xc8] sm:$0xff]
        %v384 = vld [vmem:[#allocation5 + $0xd0] sm:$0xff]
        %v385 = vld [vmem:[#allocation5 + $0xd8] sm:$0xff]
        %v386 = vld [vmem:[#allocation5 + $0xe0] sm:$0xff]
        %v387 = vld [vmem:[#allocation5 + $0xe8] sm:$0xff]
        %v388 = vld [vmem:[#allocation5 + $0xf0] sm:$0xff]
        %v389 = vld [vmem:[#allocation5 + $0xf8] sm:$0xff]
        %v390 = vld [vmem:[%s2] sm:$0x3]
        %v392 = vlaneseq
        %v393 = vshrl.u32 %v392, 7
        %v394 = vsub.s32 0, %v393
        %v395 = vrot.slane %v390, %v394
        %v396 = vlaneseq
        %v397 = vshrl.u32 %v396, 7
        %v398 = vsub.s32 1, %v397
        %v399 = vrot.slane %v390, %v398
        %v415 = vunpack.c.l.b16 %v345
        %v416 = vunpack.c.h.b16 %v345
        %v417 = vunpack.c.l.b16 %v346
        %v418 = vunpack.c.h.b16 %v346
        %v419 = vunpack.c.l.b16 %v347
        %v420 = vunpack.c.h.b16 %v347
        %v421 = vunpack.c.l.b16 %v348
        %v422 = vunpack.c.h.b16 %v348
        %v423 = vunpack.c.l.b16 %v349
        %v424 = vunpack.c.h.b16 %v349
        %v425 = vunpack.c.l.b16 %v350
        %v426 = vunpack.c.h.b16 %v350
        %v427 = vunpack.c.l.b16 %v351
        %v428 = vunpack.c.h.b16 %v351
        %v429 = vunpack.c.l.b16 %v352
        %v430 = vunpack.c.h.b16 %v352
        %v431 = vunpack.c.l.b16 %v353
        %v432 = vunpack.c.h.b16 %v353
        %v433 = vunpack.c.l.b16 %v354
        %v434 = vunpack.c.h.b16 %v354
        %v435 = vunpack.c.l.b16 %v355
        %v436 = vunpack.c.h.b16 %v355
        %v437 = vunpack.c.l.b16 %v356
        %v438 = vunpack.c.h.b16 %v356
        %v439 = vunpack.c.l.b16 %v357
        %v440 = vunpack.c.h.b16 %v357
        %v441 = vpack.c.b16 %v417, %v415
        %v442 = vpack.c.b16 %v418, %v416
        %v443 = vpack.c.b16 %v421, %v419
        %v444 = vpack.c.b16 %v422, %v420
        %v445 = vpack.c.b16 %v425, %v423
        %v446 = vpack.c.b16 %v426, %v424
        %v447 = vpack.c.b16 %v429, %v427
        %v448 = vpack.c.b16 %v430, %v428
        %v449 = vpack.c.b16 %v433, %v431
        %v450 = vpack.c.b16 %v434, %v432
        %v451 = vpack.c.b16 %v437, %v435
        %v452 = vpack.c.b16 %v438, %v436
        %v453 = vpack.c.b16 %v439, %v439
        %v454 = vpack.c.b16 %v440, %v440
        %v501 = vunpack.c.l.b16 %v358
        %v502 = vunpack.c.h.b16 %v358
        %v503 = vunpack.c.l.b16 %v359
        %v504 = vunpack.c.h.b16 %v359
        %v505 = vunpack.c.l.b16 %v360
        %v506 = vunpack.c.h.b16 %v360
        %v507 = vunpack.c.l.b16 %v361
        %v508 = vunpack.c.h.b16 %v361
        %v509 = vunpack.c.l.b16 %v362
        %v510 = vunpack.c.h.b16 %v362
        %v511 = vunpack.c.l.b16 %v363
        %v512 = vunpack.c.h.b16 %v363
        %v513 = vunpack.c.l.b16 %v364
        %v514 = vunpack.c.h.b16 %v364
        %v515 = vunpack.c.l.b16 %v365
        %v516 = vunpack.c.h.b16 %v365
        %v517 = vunpack.c.l.b16 %v366
        %v518 = vunpack.c.h.b16 %v366
        %v519 = vunpack.c.l.b16 %v367
        %v520 = vunpack.c.h.b16 %v367
        %v521 = vunpack.c.l.b16 %v368
        %v522 = vunpack.c.h.b16 %v368
        %v523 = vunpack.c.l.b16 %v369
        %v524 = vunpack.c.h.b16 %v369
        %v525 = vunpack.c.l.b16 %v370
        %v526 = vunpack.c.h.b16 %v370
        %v527 = vunpack.c.l.b16 %v371
        %v528 = vunpack.c.h.b16 %v371
        %v529 = vunpack.c.l.b16 %v372
        %v530 = vunpack.c.h.b16 %v372
        %v531 = vunpack.c.l.b16 %v373
        %v532 = vunpack.c.h.b16 %v373
        %v533 = vunpack.c.l.b16 %v374
        %v534 = vunpack.c.h.b16 %v374
        %v535 = vunpack.c.l.b16 %v375
        %v536 = vunpack.c.h.b16 %v375
        %v537 = vunpack.c.l.b16 %v376
        %v538 = vunpack.c.h.b16 %v376
        %v539 = vunpack.c.l.b16 %v377
        %v540 = vunpack.c.h.b16 %v377
        %v541 = vunpack.c.l.b16 %v378
        %v542 = vunpack.c.h.b16 %v378
        %v543 = vunpack.c.l.b16 %v379
        %v544 = vunpack.c.h.b16 %v379
        %v545 = vunpack.c.l.b16 %v380
        %v546 = vunpack.c.h.b16 %v380
        %v547 = vunpack.c.l.b16 %v381
        %v548 = vunpack.c.h.b16 %v381
        %v549 = vunpack.c.l.b16 %v382
        %v550 = vunpack.c.h.b16 %v382
        %v551 = vunpack.c.l.b16 %v383
        %v552 = vunpack.c.h.b16 %v383
        %v553 = vunpack.c.l.b16 %v384
        %v554 = vunpack.c.h.b16 %v384
        %v555 = vunpack.c.l.b16 %v385
        %v556 = vunpack.c.h.b16 %v385
        %v557 = vunpack.c.l.b16 %v386
        %v558 = vunpack.c.h.b16 %v386
        %v559 = vunpack.c.l.b16 %v387
        %v560 = vunpack.c.h.b16 %v387
        %v561 = vunpack.c.l.b16 %v388
        %v562 = vunpack.c.h.b16 %v388
        %v563 = vunpack.c.l.b16 %v389
        %v564 = vunpack.c.h.b16 %v389
        %v565 = vpack.c.b16 %v503, %v501
        %v566 = vpack.c.b16 %v504, %v502
        %v567 = vpack.c.b16 %v507, %v505
        %v568 = vpack.c.b16 %v508, %v506
        %v569 = vpack.c.b16 %v511, %v509
        %v570 = vpack.c.b16 %v512, %v510
        %v571 = vpack.c.b16 %v515, %v513
        %v572 = vpack.c.b16 %v516, %v514
        %v573 = vpack.c.b16 %v519, %v517
        %v574 = vpack.c.b16 %v520, %v518
        %v575 = vpack.c.b16 %v523, %v521
        %v576 = vpack.c.b16 %v524, %v522
        %v577 = vpack.c.b16 %v527, %v525
        %v578 = vpack.c.b16 %v528, %v526
        %v579 = vpack.c.b16 %v531, %v529
        %v580 = vpack.c.b16 %v532, %v530
        %v581 = vpack.c.b16 %v535, %v533
        %v582 = vpack.c.b16 %v536, %v534
        %v583 = vpack.c.b16 %v539, %v537
        %v584 = vpack.c.b16 %v540, %v538
        %v585 = vpack.c.b16 %v543, %v541
        %v586 = vpack.c.b16 %v544, %v542
        %v587 = vpack.c.b16 %v547, %v545
        %v588 = vpack.c.b16 %v548, %v546
        %v589 = vpack.c.b16 %v551, %v549
        %v590 = vpack.c.b16 %v552, %v550
        %v591 = vpack.c.b16 %v555, %v553
        %v592 = vpack.c.b16 %v556, %v554
        %v593 = vpack.c.b16 %v559, %v557
        %v594 = vpack.c.b16 %v560, %v558
        %v595 = vpack.c.b16 %v563, %v561
        %v596 = vpack.c.b16 %v564, %v562
        %629 = vmatprep.subr.bf16.mxu0 %v580
        %630 = vmatpush1.bf16.msra.mxu0 %v579
        %631 = vmatprep.subr.bf16.mxu0 %v578
        %632 = vmatpush1.bf16.msra.mxu0 %v577
        %633 = vmatprep.subr.bf16.mxu0 %v576
        %634 = vmatpush1.bf16.msra.mxu0 %v575
        %635 = vmatprep.subr.bf16.mxu0 %v574
        %636 = vmatpush1.bf16.msra.mxu0 %v573
        %637 = vmatprep.subr.bf16.mxu0 %v572
        %638 = vmatpush1.bf16.msra.mxu0 %v571
        %639 = vmatprep.subr.bf16.mxu0 %v570
        %640 = vmatpush1.bf16.msra.mxu0 %v569
        %641 = vmatprep.subr.bf16.mxu0 %v568
        %642 = vmatpush1.bf16.msra.mxu0 %v567
        %643 = vmatprep.subr.bf16.mxu0 %v566
        %644 = vmatpush1.bf16.msra.mxu0 %v565
        %645 = vmatprep.subr.bf16.mxu0 %v596
        %646 = vmatpush2.bf16.msra.mxu0 %v595
        %647 = vmatprep.subr.bf16.mxu0 %v594
        %648 = vmatpush2.bf16.msra.mxu0 %v593
        %649 = vmatprep.subr.bf16.mxu0 %v592
        %650 = vmatpush2.bf16.msra.mxu0 %v591
        %651 = vmatprep.subr.bf16.mxu0 %v590
        %652 = vmatpush2.bf16.msra.mxu0 %v589
        %653 = vmatprep.subr.bf16.mxu0 %v588
        %654 = vmatpush2.bf16.msra.mxu0 %v587
        %655 = vmatprep.subr.bf16.mxu0 %v586
        %656 = vmatpush2.bf16.msra.mxu0 %v585
        %657 = vmatprep.subr.bf16.mxu0 %v584
        %658 = vmatpush2.bf16.msra.mxu0 %v583
        %659 = vmatprep.subr.bf16.mxu0 %v582
        %660 = vmatpush2.bf16.msra.mxu0 %v581
        %661 = vmatprep.mubr.bf16.mxu0 %v442
        %662 = vmatmul.mubr.bf16.gmra.mxu0 %v441
        %v663 = vpop.f32.mrf.mxu0
        %v664 = vadd.f32 %v395, %v663
        %v665 = vpop.f32.mrf.mxu0
        %v666 = vadd.f32 %v399, %v665
        %v667 = vpop.f32.mrf.mxu0
        %v668 = vadd.f32 %v395, %v667
        %v669 = vpop.f32.mrf.mxu0
        %v670 = vadd.f32 %v399, %v669
        %671 = vmatprep.mubr.bf16.mxu0 %v444
        %672 = vmatmul.mubr.bf16.gmra.mxu0 %v443
        %v673 = vpop.f32.mrf.mxu0
        %v674 = vadd.f32 %v395, %v673
        %v675 = vpop.f32.mrf.mxu0
        %v676 = vadd.f32 %v399, %v675
        %v677 = vpop.f32.mrf.mxu0
        %v678 = vadd.f32 %v395, %v677
        %v679 = vpop.f32.mrf.mxu0
        %v680 = vadd.f32 %v399, %v679
        %681 = vmatprep.mubr.bf16.mxu0 %v446
        %682 = vmatmul.mubr.bf16.gmra.mxu0 %v445
        %v683 = vpop.f32.mrf.mxu0
        %v684 = vadd.f32 %v395, %v683
        %v685 = vpop.f32.mrf.mxu0
        %v686 = vadd.f32 %v399, %v685
        %v687 = vpop.f32.mrf.mxu0
        %v688 = vadd.f32 %v395, %v687
        %v689 = vpop.f32.mrf.mxu0
        %v690 = vadd.f32 %v399, %v689
        %691 = vmatprep.mubr.bf16.mxu0 %v448
        %692 = vmatmul.mubr.bf16.gmra.mxu0 %v447
        %v693 = vpop.f32.mrf.mxu0
        %v694 = vadd.f32 %v395, %v693
        %v695 = vpop.f32.mrf.mxu0
        %v696 = vadd.f32 %v399, %v695
        %v697 = vpop.f32.mrf.mxu0
        %v698 = vadd.f32 %v395, %v697
        %v699 = vpop.f32.mrf.mxu0
        %v700 = vadd.f32 %v399, %v699
        %701 = vmatprep.mubr.bf16.mxu0 %v450
        %702 = vmatmul.mubr.bf16.gmra.mxu0 %v449
        %v703 = vpop.f32.mrf.mxu0
        %v704 = vadd.f32 %v395, %v703
        %v705 = vpop.f32.mrf.mxu0
        %v706 = vadd.f32 %v399, %v705
        %v707 = vpop.f32.mrf.mxu0
        %v708 = vadd.f32 %v395, %v707
        %v709 = vpop.f32.mrf.mxu0
        %v710 = vadd.f32 %v399, %v709
        %711 = vmatprep.mubr.bf16.mxu0 %v452
        %712 = vmatmul.mubr.bf16.gmra.mxu0 %v451
        %v713 = vpop.f32.mrf.mxu0
        %v714 = vadd.f32 %v395, %v713
        %v715 = vpop.f32.mrf.mxu0
        %v716 = vadd.f32 %v399, %v715
        %v717 = vpop.f32.mrf.mxu0
        %v718 = vadd.f32 %v395, %v717
        %v719 = vpop.f32.mrf.mxu0
        %v720 = vadd.f32 %v399, %v719
        %721 = vmatprep.mubr.bf16.mxu0 %v454
        %722 = vmatmul.mubr.bf16.gmra.mxu0 %v453
        %v723 = vpop.f32.mrf.mxu0
        %v724 = vadd.f32 %v395, %v723
        %v725 = vpop.f32.mrf.mxu0
        %v726 = vadd.f32 %v399, %v725
        %v727 = vpop.f32.mrf.mxu0
        %v728 = vpop.f32.mrf.mxu0
        %729 = vdwg.mxu0
        %v730 = vmax.f32 %v664, 0.0
        %v731 = vmax.f32 %v666, 0.0
        %v732 = vmax.f32 %v668, 0.0
        %v733 = vmax.f32 %v670, 0.0
        %v734 = vmax.f32 %v674, 0.0
        %v735 = vmax.f32 %v676, 0.0
        %v736 = vmax.f32 %v678, 0.0
        %v737 = vmax.f32 %v680, 0.0
        %v738 = vmax.f32 %v684, 0.0
        %v739 = vmax.f32 %v686, 0.0
        %v740 = vmax.f32 %v688, 0.0
        %v741 = vmax.f32 %v690, 0.0
        %v742 = vmax.f32 %v694, 0.0
        %v743 = vmax.f32 %v696, 0.0
        %v744 = vmax.f32 %v698, 0.0
        %v745 = vmax.f32 %v700, 0.0
        %v746 = vmax.f32 %v704, 0.0
        %v747 = vmax.f32 %v706, 0.0
        %v748 = vmax.f32 %v708, 0.0
        %v749 = vmax.f32 %v710, 0.0
        %v750 = vmax.f32 %v714, 0.0
        %v751 = vmax.f32 %v716, 0.0
        %v752 = vmax.f32 %v718, 0.0
        %v753 = vmax.f32 %v720, 0.0
        %v754 = vmax.f32 %v724, 0.0
        %v755 = vmax.f32 %v726, 0.0
        %v756 = vpack.c.bf16 %v732, %v730
        %v757 = vpack.c.bf16 %v733, %v731
        %v758 = vpack.c.bf16 %v736, %v734
        %v759 = vpack.c.bf16 %v737, %v735
        %v760 = vpack.c.bf16 %v740, %v738
        %v761 = vpack.c.bf16 %v741, %v739
        %v762 = vpack.c.bf16 %v744, %v742
        %v763 = vpack.c.bf16 %v745, %v743
        %v764 = vpack.c.bf16 %v748, %v746
        %v765 = vpack.c.bf16 %v749, %v747
        %v766 = vpack.c.bf16 %v752, %v750
        %v767 = vpack.c.bf16 %v753, %v751
        %v768 = vpack.c.bf16 %v754, %v754
        %v769 = vpack.c.bf16 %v755, %v755
        %v770 = vld [vmem:[#allocation7] sm:$0xff]
        %v771 = vld [vmem:[#allocation7 + $0x8] sm:$0xff]
        %v772 = vld [vmem:[#allocation7 + $0x10] sm:$0xff]
        %v773 = vld [vmem:[#allocation7 + $0x18] sm:$0xff]
        %v774 = vld [vmem:[#allocation7 + $0x20] sm:$0xff]
        %v775 = vld [vmem:[#allocation7 + $0x28] sm:$0xff]
        %v776 = vld [vmem:[#allocation7 + $0x30] sm:$0xff]
        %v777 = vld [vmem:[#allocation7 + $0x38] sm:$0xff]
        %v778 = vld [vmem:[#allocation7 + $0x40] sm:$0xff]
        %v779 = vld [vmem:[#allocation7 + $0x48] sm:$0xff]
        %v780 = vld [vmem:[#allocation7 + $0x50] sm:$0xff]
        %v781 = vld [vmem:[#allocation7 + $0x58] sm:$0xff]
        %v782 = vld [vmem:[#allocation7 + $0x60] sm:$0xff]
        %v783 = vld [vmem:[#allocation7 + $0x68] sm:$0xff]
        %v784 = vld [vmem:[#allocation7 + $0x70] sm:$0xff]
        %v785 = vld [vmem:[#allocation7 + $0x78] sm:$0xff]
        %v786 = vld [vmem:[#allocation7 + $0x80] sm:$0xff]
        %v787 = vld [vmem:[#allocation7 + $0x88] sm:$0xff]
        %v788 = vld [vmem:[#allocation7 + $0x90] sm:$0xff]
        %v789 = vld [vmem:[#allocation7 + $0x98] sm:$0xff]
        %v790 = vld [vmem:[#allocation7 + $0xa0] sm:$0xff]
        %v791 = vld [vmem:[#allocation7 + $0xa8] sm:$0xff]
        %v792 = vld [vmem:[#allocation7 + $0xb0] sm:$0xff]
        %v793 = vld [vmem:[#allocation7 + $0xb8] sm:$0xff]
        %v794 = vld [vmem:[#allocation7 + $0xc0] sm:$0xff]
        %v795 = vld [vmem:[#allocation7 + $0xc8] sm:$0xff]
        %v796 = vld [vmem:[#allocation7 + $0xd0] sm:$0xff]
        %v797 = vld [vmem:[#allocation7 + $0xd8] sm:$0xff]
        %v798 = vld [vmem:[#allocation7 + $0xe0] sm:$0xff]
        %v799 = vld [vmem:[#allocation7 + $0xe8] sm:$0xff]
        %v800 = vld [vmem:[#allocation7 + $0xf0] sm:$0xff]
        %v801 = vld [vmem:[#allocation7 + $0xf8] sm:$0xff]
        %v802 = vld [vmem:[%s4] sm:$0x3]
        %v804 = vlaneseq
        %v805 = vshrl.u32 %v804, 7
        %v806 = vsub.s32 0, %v805
        %v807 = vrot.slane %v802, %v806
        %v808 = vlaneseq
        %v809 = vshrl.u32 %v808, 7
        %v810 = vsub.s32 1, %v809
        %v811 = vrot.slane %v802, %v810
        %v846 = vunpack.c.l.b16 %v770
        %v847 = vunpack.c.h.b16 %v770
        %v848 = vunpack.c.l.b16 %v771
        %v849 = vunpack.c.h.b16 %v771
        %v850 = vunpack.c.l.b16 %v772
        %v851 = vunpack.c.h.b16 %v772
        %v852 = vunpack.c.l.b16 %v773
        %v853 = vunpack.c.h.b16 %v773
        %v854 = vunpack.c.l.b16 %v774
        %v855 = vunpack.c.h.b16 %v774
        %v856 = vunpack.c.l.b16 %v775
        %v857 = vunpack.c.h.b16 %v775
        %v858 = vunpack.c.l.b16 %v776
        %v859 = vunpack.c.h.b16 %v776
        %v860 = vunpack.c.l.b16 %v777
        %v861 = vunpack.c.h.b16 %v777
        %v862 = vunpack.c.l.b16 %v778
        %v863 = vunpack.c.h.b16 %v778
        %v864 = vunpack.c.l.b16 %v779
        %v865 = vunpack.c.h.b16 %v779
        %v866 = vunpack.c.l.b16 %v780
        %v867 = vunpack.c.h.b16 %v780
        %v868 = vunpack.c.l.b16 %v781
        %v869 = vunpack.c.h.b16 %v781
        %v870 = vunpack.c.l.b16 %v782
        %v871 = vunpack.c.h.b16 %v782
        %v872 = vunpack.c.l.b16 %v783
        %v873 = vunpack.c.h.b16 %v783
        %v874 = vunpack.c.l.b16 %v784
        %v875 = vunpack.c.h.b16 %v784
        %v876 = vunpack.c.l.b16 %v785
        %v877 = vunpack.c.h.b16 %v785
        %v878 = vunpack.c.l.b16 %v786
        %v879 = vunpack.c.h.b16 %v786
        %v880 = vunpack.c.l.b16 %v787
        %v881 = vunpack.c.h.b16 %v787
        %v882 = vunpack.c.l.b16 %v788
        %v883 = vunpack.c.h.b16 %v788
        %v884 = vunpack.c.l.b16 %v789
        %v885 = vunpack.c.h.b16 %v789
        %v886 = vunpack.c.l.b16 %v790
        %v887 = vunpack.c.h.b16 %v790
        %v888 = vunpack.c.l.b16 %v791
        %v889 = vunpack.c.h.b16 %v791
        %v890 = vunpack.c.l.b16 %v792
        %v891 = vunpack.c.h.b16 %v792
        %v892 = vunpack.c.l.b16 %v793
        %v893 = vunpack.c.h.b16 %v793
        %v894 = vunpack.c.l.b16 %v794
        %v895 = vunpack.c.h.b16 %v794
        %v896 = vunpack.c.l.b16 %v795
        %v897 = vunpack.c.h.b16 %v795
        %v898 = vunpack.c.l.b16 %v796
        %v899 = vunpack.c.h.b16 %v796
        %v900 = vunpack.c.l.b16 %v797
        %v901 = vunpack.c.h.b16 %v797
        %v902 = vunpack.c.l.b16 %v798
        %v903 = vunpack.c.h.b16 %v798
        %v904 = vunpack.c.l.b16 %v799
        %v905 = vunpack.c.h.b16 %v799
        %v906 = vunpack.c.l.b16 %v800
        %v907 = vunpack.c.h.b16 %v800
        %v908 = vunpack.c.l.b16 %v801
        %v909 = vunpack.c.h.b16 %v801
        %v910 = vpack.c.b16 %v848, %v846
        %v911 = vpack.c.b16 %v849, %v847
        %v912 = vpack.c.b16 %v852, %v850
        %v913 = vpack.c.b16 %v853, %v851
        %v914 = vpack.c.b16 %v856, %v854
        %v915 = vpack.c.b16 %v857, %v855
        %v916 = vpack.c.b16 %v860, %v858
        %v917 = vpack.c.b16 %v861, %v859
        %v918 = vpack.c.b16 %v864, %v862
        %v919 = vpack.c.b16 %v865, %v863
        %v920 = vpack.c.b16 %v868, %v866
        %v921 = vpack.c.b16 %v869, %v867
        %v922 = vpack.c.b16 %v872, %v870
        %v923 = vpack.c.b16 %v873, %v871
        %v924 = vpack.c.b16 %v876, %v874
        %v925 = vpack.c.b16 %v877, %v875
        %v926 = vpack.c.b16 %v880, %v878
        %v927 = vpack.c.b16 %v881, %v879
        %v928 = vpack.c.b16 %v884, %v882
        %v929 = vpack.c.b16 %v885, %v883
        %v930 = vpack.c.b16 %v888, %v886
        %v931 = vpack.c.b16 %v889, %v887
        %v932 = vpack.c.b16 %v892, %v890
        %v933 = vpack.c.b16 %v893, %v891
        %v934 = vpack.c.b16 %v896, %v894
        %v935 = vpack.c.b16 %v897, %v895
        %v936 = vpack.c.b16 %v900, %v898
        %v937 = vpack.c.b16 %v901, %v899
        %v938 = vpack.c.b16 %v904, %v902
        %v939 = vpack.c.b16 %v905, %v903
        %v940 = vpack.c.b16 %v908, %v906
        %v941 = vpack.c.b16 %v909, %v907
        %974 = vmatprep.subr.bf16.mxu0 %v925
        %975 = vmatpush1.bf16.msra.mxu0 %v924
        %976 = vmatprep.subr.bf16.mxu0 %v923
        %977 = vmatpush1.bf16.msra.mxu0 %v922
        %978 = vmatprep.subr.bf16.mxu0 %v921
        %979 = vmatpush1.bf16.msra.mxu0 %v920
        %980 = vmatprep.subr.bf16.mxu0 %v919
        %981 = vmatpush1.bf16.msra.mxu0 %v918
        %982 = vmatprep.subr.bf16.mxu0 %v917
        %983 = vmatpush1.bf16.msra.mxu0 %v916
        %984 = vmatprep.subr.bf16.mxu0 %v915
        %985 = vmatpush1.bf16.msra.mxu0 %v914
        %986 = vmatprep.subr.bf16.mxu0 %v913
        %987 = vmatpush1.bf16.msra.mxu0 %v912
        %988 = vmatprep.subr.bf16.mxu0 %v911
        %989 = vmatpush1.bf16.msra.mxu0 %v910
        %990 = vmatprep.subr.bf16.mxu0 %v941
        %991 = vmatpush2.bf16.msra.mxu0 %v940
        %992 = vmatprep.subr.bf16.mxu0 %v939
        %993 = vmatpush2.bf16.msra.mxu0 %v938
        %994 = vmatprep.subr.bf16.mxu0 %v937
        %995 = vmatpush2.bf16.msra.mxu0 %v936
        %996 = vmatprep.subr.bf16.mxu0 %v935
        %997 = vmatpush2.bf16.msra.mxu0 %v934
        %998 = vmatprep.subr.bf16.mxu0 %v933
        %999 = vmatpush2.bf16.msra.mxu0 %v932
        %1000 = vmatprep.subr.bf16.mxu0 %v931
        %1001 = vmatpush2.bf16.msra.mxu0 %v930
        %1002 = vmatprep.subr.bf16.mxu0 %v929
        %1003 = vmatpush2.bf16.msra.mxu0 %v928
        %1004 = vmatprep.subr.bf16.mxu0 %v927
        %1005 = vmatpush2.bf16.msra.mxu0 %v926
        %1006 = vmatprep.mubr.bf16.mxu0 %v757
        %1007 = vmatmul.mubr.bf16.gmra.mxu0 %v756
        %v1008 = vpop.f32.mrf.mxu0
        %v1009 = vadd.f32 %v807, %v1008
        %v1010 = vpop.f32.mrf.mxu0
        %v1011 = vadd.f32 %v811, %v1010
        %v1012 = vpop.f32.mrf.mxu0
        %v1013 = vadd.f32 %v807, %v1012
        %v1014 = vpop.f32.mrf.mxu0
        %v1015 = vadd.f32 %v811, %v1014
        %1016 = vmatprep.mubr.bf16.mxu0 %v759
        %1017 = vmatmul.mubr.bf16.gmra.mxu0 %v758
        %v1018 = vpop.f32.mrf.mxu0
        %v1019 = vadd.f32 %v807, %v1018
        %v1020 = vpop.f32.mrf.mxu0
        %v1021 = vadd.f32 %v811, %v1020
        %v1022 = vpop.f32.mrf.mxu0
        %v1023 = vadd.f32 %v807, %v1022
        %v1024 = vpop.f32.mrf.mxu0
        %v1025 = vadd.f32 %v811, %v1024
        %1026 = vmatprep.mubr.bf16.mxu0 %v761
        %1027 = vmatmul.mubr.bf16.gmra.mxu0 %v760
        %v1028 = vpop.f32.mrf.mxu0
        %v1029 = vadd.f32 %v807, %v1028
        %v1030 = vpop.f32.mrf.mxu0
        %v1031 = vadd.f32 %v811, %v1030
        %v1032 = vpop.f32.mrf.mxu0
        %v1033 = vadd.f32 %v807, %v1032
        %v1034 = vpop.f32.mrf.mxu0
        %v1035 = vadd.f32 %v811, %v1034
        %1036 = vmatprep.mubr.bf16.mxu0 %v763
        %1037 = vmatmul.mubr.bf16.gmra.mxu0 %v762
        %v1038 = vpop.f32.mrf.mxu0
        %v1039 = vadd.f32 %v807, %v1038
        %v1040 = vpop.f32.mrf.mxu0
        %v1041 = vadd.f32 %v811, %v1040
        %v1042 = vpop.f32.mrf.mxu0
        %v1043 = vadd.f32 %v807, %v1042
        %v1044 = vpop.f32.mrf.mxu0
        %v1045 = vadd.f32 %v811, %v1044
        %1046 = vmatprep.mubr.bf16.mxu0 %v765
        %1047 = vmatmul.mubr.bf16.gmra.mxu0 %v764
        %v1048 = vpop.f32.mrf.mxu0
        %v1049 = vadd.f32 %v807, %v1048
        %v1050 = vpop.f32.mrf.mxu0
        %v1051 = vadd.f32 %v811, %v1050
        %v1052 = vpop.f32.mrf.mxu0
        %v1053 = vadd.f32 %v807, %v1052
        %v1054 = vpop.f32.mrf.mxu0
        %v1055 = vadd.f32 %v811, %v1054
        %1056 = vmatprep.mubr.bf16.mxu0 %v767
        %1057 = vmatmul.mubr.bf16.gmra.mxu0 %v766
        %v1058 = vpop.f32.mrf.mxu0
        %v1059 = vadd.f32 %v807, %v1058
        %v1060 = vpop.f32.mrf.mxu0
        %v1061 = vadd.f32 %v811, %v1060
        %v1062 = vpop.f32.mrf.mxu0
        %v1063 = vadd.f32 %v807, %v1062
        %v1064 = vpop.f32.mrf.mxu0
        %v1065 = vadd.f32 %v811, %v1064
        %1066 = vmatprep.mubr.bf16.mxu0 %v769
        %1067 = vmatmul.mubr.bf16.gmra.mxu0 %v768
        %v1068 = vpop.f32.mrf.mxu0
        %v1069 = vadd.f32 %v807, %v1068
        %v1070 = vpop.f32.mrf.mxu0
        %v1071 = vadd.f32 %v811, %v1070
        %v1072 = vpop.f32.mrf.mxu0
        %v1073 = vpop.f32.mrf.mxu0
        %1074 = vdwg.mxu0
        %v1075 = vmax.f32 %v1009, 0.0
        %v1076 = vmax.f32 %v1011, 0.0
        %v1077 = vmax.f32 %v1013, 0.0
        %v1078 = vmax.f32 %v1015, 0.0
        %v1079 = vmax.f32 %v1019, 0.0
        %v1080 = vmax.f32 %v1021, 0.0
        %v1081 = vmax.f32 %v1023, 0.0
        %v1082 = vmax.f32 %v1025, 0.0
        %v1083 = vmax.f32 %v1029, 0.0
        %v1084 = vmax.f32 %v1031, 0.0
        %v1085 = vmax.f32 %v1033, 0.0
        %v1086 = vmax.f32 %v1035, 0.0
        %v1087 = vmax.f32 %v1039, 0.0
        %v1088 = vmax.f32 %v1041, 0.0
        %v1089 = vmax.f32 %v1043, 0.0
        %v1090 = vmax.f32 %v1045, 0.0
        %v1091 = vmax.f32 %v1049, 0.0
        %v1092 = vmax.f32 %v1051, 0.0
        %v1093 = vmax.f32 %v1053, 0.0
        %v1094 = vmax.f32 %v1055, 0.0
        %v1095 = vmax.f32 %v1059, 0.0
        %v1096 = vmax.f32 %v1061, 0.0
        %v1097 = vmax.f32 %v1063, 0.0
        %v1098 = vmax.f32 %v1065, 0.0
        %v1099 = vmax.f32 %v1069, 0.0
        %v1100 = vmax.f32 %v1071, 0.0
        %v1101 = vpack.c.bf16 %v1077, %v1075
        %v1102 = vpack.c.bf16 %v1078, %v1076
        %v1103 = vpack.c.bf16 %v1081, %v1079
        %v1104 = vpack.c.bf16 %v1082, %v1080
        %v1105 = vpack.c.bf16 %v1085, %v1083
        %v1106 = vpack.c.bf16 %v1086, %v1084
        %v1107 = vpack.c.bf16 %v1089, %v1087
        %v1108 = vpack.c.bf16 %v1090, %v1088
        %v1109 = vpack.c.bf16 %v1093, %v1091
        %v1110 = vpack.c.bf16 %v1094, %v1092
        %v1111 = vpack.c.bf16 %v1097, %v1095
        %v1112 = vpack.c.bf16 %v1098, %v1096
        %v1113 = vpack.c.bf16 %v1099, %v1099
        %v1114 = vpack.c.bf16 %v1100, %v1100
        %v1115 = vld [vmem:[#allocation8] sm:$0xf]
        %v1116 = vld [vmem:[#allocation8 + $0x4] sm:$0xf]
        %v1117 = vld [vmem:[#allocation8 + $0x8] sm:$0xf]
        %v1118 = vld [vmem:[#allocation8 + $0xc] sm:$0xf]
        %v1119 = vld [vmem:[#allocation8 + $0x10] sm:$0xf]
        %v1120 = vld [vmem:[#allocation8 + $0x14] sm:$0xf]
        %v1121 = vld [vmem:[#allocation8 + $0x18] sm:$0xf]
        %v1122 = vld [vmem:[#allocation8 + $0x1c] sm:$0xf]
        %v1123 = vld [vmem:[#allocation8 + $0x20] sm:$0xf]
        %v1124 = vld [vmem:[#allocation8 + $0x24] sm:$0xf]
        %v1125 = vld [vmem:[#allocation8 + $0x28] sm:$0xf]
        %v1126 = vld [vmem:[#allocation8 + $0x2c] sm:$0xf]
        %v1127 = vld [vmem:[#allocation8 + $0x30] sm:$0xf]
        %v1128 = vld [vmem:[#allocation8 + $0x34] sm:$0xf]
        %v1129 = vld [vmem:[#allocation8 + $0x38] sm:$0xf]
        %v1130 = vld [vmem:[#allocation8 + $0x3c] sm:$0xf]
        %v1131 = vld [vmem:[#allocation8 + $0x40] sm:$0xf]
        %v1132 = vld [vmem:[#allocation8 + $0x44] sm:$0xf]
        %v1133 = vld [vmem:[#allocation8 + $0x48] sm:$0xf]
        %v1134 = vld [vmem:[#allocation8 + $0x4c] sm:$0xf]
        %v1135 = vld [vmem:[#allocation8 + $0x50] sm:$0xf]
        %v1136 = vld [vmem:[#allocation8 + $0x54] sm:$0xf]
        %v1137 = vld [vmem:[#allocation8 + $0x58] sm:$0xf]
        %v1138 = vld [vmem:[#allocation8 + $0x5c] sm:$0xf]
        %v1139 = vld [vmem:[#allocation8 + $0x60] sm:$0xf]
        %v1140 = vld [vmem:[#allocation8 + $0x64] sm:$0xf]
        %v1141 = vld [vmem:[#allocation8 + $0x68] sm:$0xf]
        %v1142 = vld [vmem:[#allocation8 + $0x6c] sm:$0xf]
        %v1143 = vld [vmem:[#allocation8 + $0x70] sm:$0xf]
        %v1144 = vld [vmem:[#allocation8 + $0x74] sm:$0xf]
        %v1145 = vld [vmem:[#allocation8 + $0x78] sm:$0xf]
        %v1146 = vld [vmem:[#allocation8 + $0x7c] sm:$0xf]
        %v1147 = vld [vmem:[%s6] sm:$0x1]
        %v1149 = vlaneseq
        %v1150 = vshrl.u32 %v1149, 7
        %v1151 = vsub.s32 0, %v1150
        %v1152 = vrot.slane %v1147, %v1151
        %v1186 = vunpack.c.l.b16 %v1115
        %v1187 = vunpack.c.l.b16 %v1116
        %v1188 = vunpack.c.l.b16 %v1117
        %v1189 = vunpack.c.l.b16 %v1118
        %v1190 = vunpack.c.l.b16 %v1119
        %v1191 = vunpack.c.l.b16 %v1120
        %v1192 = vunpack.c.l.b16 %v1121
        %v1193 = vunpack.c.l.b16 %v1122
        %v1194 = vunpack.c.l.b16 %v1123
        %v1195 = vunpack.c.l.b16 %v1124
        %v1196 = vunpack.c.l.b16 %v1125
        %v1197 = vunpack.c.l.b16 %v1126
        %v1198 = vunpack.c.l.b16 %v1127
        %v1199 = vunpack.c.l.b16 %v1128
        %v1200 = vunpack.c.l.b16 %v1129
        %v1201 = vunpack.c.l.b16 %v1130
        %v1202 = vunpack.c.l.b16 %v1131
        %v1203 = vunpack.c.l.b16 %v1132
        %v1204 = vunpack.c.l.b16 %v1133
        %v1205 = vunpack.c.l.b16 %v1134
        %v1206 = vunpack.c.l.b16 %v1135
        %v1207 = vunpack.c.l.b16 %v1136
        %v1208 = vunpack.c.l.b16 %v1137
        %v1209 = vunpack.c.l.b16 %v1138
        %v1210 = vunpack.c.l.b16 %v1139
        %v1211 = vunpack.c.l.b16 %v1140
        %v1212 = vunpack.c.l.b16 %v1141
        %v1213 = vunpack.c.l.b16 %v1142
        %v1214 = vunpack.c.l.b16 %v1143
        %v1215 = vunpack.c.l.b16 %v1144
        %v1216 = vunpack.c.l.b16 %v1145
        %v1217 = vunpack.c.l.b16 %v1146
        %v1218 = vpack.c.b16 %v1187, %v1186
        %v1219 = vpack.c.b16 %v1189, %v1188
        %v1220 = vpack.c.b16 %v1191, %v1190
        %v1221 = vpack.c.b16 %v1193, %v1192
        %v1222 = vpack.c.b16 %v1195, %v1194
        %v1223 = vpack.c.b16 %v1197, %v1196
        %v1224 = vpack.c.b16 %v1199, %v1198
        %v1225 = vpack.c.b16 %v1201, %v1200
        %v1226 = vpack.c.b16 %v1203, %v1202
        %v1227 = vpack.c.b16 %v1205, %v1204
        %v1228 = vpack.c.b16 %v1207, %v1206
        %v1229 = vpack.c.b16 %v1209, %v1208
        %v1230 = vpack.c.b16 %v1211, %v1210
        %v1231 = vpack.c.b16 %v1213, %v1212
        %v1232 = vpack.c.b16 %v1215, %v1214
        %v1233 = vpack.c.b16 %v1217, %v1216
        %1250 = vmatprep.subr.bf16.mxu0 0
        %1251 = vmatpush1.bf16.msra.mxu0 %v1225
        %1252 = vmatprep.subr.bf16.mxu0 0
        %1253 = vmatpush1.bf16.msra.mxu0 %v1224
        %1254 = vmatprep.subr.bf16.mxu0 0
        %1255 = vmatpush1.bf16.msra.mxu0 %v1223
        %1256 = vmatprep.subr.bf16.mxu0 0
        %1257 = vmatpush1.bf16.msra.mxu0 %v1222
        %1258 = vmatprep.subr.bf16.mxu0 0
        %1259 = vmatpush1.bf16.msra.mxu0 %v1221
        %1260 = vmatprep.subr.bf16.mxu0 0
        %1261 = vmatpush1.bf16.msra.mxu0 %v1220
        %1262 = vmatprep.subr.bf16.mxu0 0
        %1263 = vmatpush1.bf16.msra.mxu0 %v1219
        %1264 = vmatprep.subr.bf16.mxu0 0
        %1265 = vmatpush1.bf16.msra.mxu0 %v1218
        %1266 = vmatprep.subr.bf16.mxu0 0
        %1267 = vmatpush2.bf16.msra.mxu0 %v1233
        %1268 = vmatprep.subr.bf16.mxu0 0
        %1269 = vmatpush2.bf16.msra.mxu0 %v1232
        %1270 = vmatprep.subr.bf16.mxu0 0
        %1271 = vmatpush2.bf16.msra.mxu0 %v1231
        %1272 = vmatprep.subr.bf16.mxu0 0
        %1273 = vmatpush2.bf16.msra.mxu0 %v1230
        %1274 = vmatprep.subr.bf16.mxu0 0
        %1275 = vmatpush2.bf16.msra.mxu0 %v1229
        %1276 = vmatprep.subr.bf16.mxu0 0
        %1277 = vmatpush2.bf16.msra.mxu0 %v1228
        %1278 = vmatprep.subr.bf16.mxu0 0
        %1279 = vmatpush2.bf16.msra.mxu0 %v1227
        %1280 = vmatprep.subr.bf16.mxu0 0
        %1281 = vmatpush2.bf16.msra.mxu0 %v1226
        %1282 = vmatprep.mubr.bf16.mxu0 %v1102
        %1283 = vmatmul.mubr.bf16.gmra.mxu0 %v1101
        %v1284 = vpop.f32.mrf.mxu0
        %v1285 = vadd.f32 %v1152, %v1284
        %v1286 = vpop.f32.mrf.mxu0
        %v1287 = vpop.f32.mrf.mxu0
        %v1288 = vadd.f32 %v1152, %v1287
        %v1289 = vpop.f32.mrf.mxu0
        %1290 = vmatprep.mubr.bf16.mxu0 %v1104
        %1291 = vmatmul.mubr.bf16.gmra.mxu0 %v1103
        %v1292 = vpop.f32.mrf.mxu0
        %v1293 = vadd.f32 %v1152, %v1292
        %v1294 = vpop.f32.mrf.mxu0
        %v1295 = vpop.f32.mrf.mxu0
        %v1296 = vadd.f32 %v1152, %v1295
        %v1297 = vpop.f32.mrf.mxu0
        %1298 = vmatprep.mubr.bf16.mxu0 %v1106
        %1299 = vmatmul.mubr.bf16.gmra.mxu0 %v1105
        %v1300 = vpop.f32.mrf.mxu0
        %v1301 = vadd.f32 %v1152, %v1300
        %v1302 = vpop.f32.mrf.mxu0
        %v1303 = vpop.f32.mrf.mxu0
        %v1304 = vadd.f32 %v1152, %v1303
        %v1305 = vpop.f32.mrf.mxu0
        %1306 = vmatprep.mubr.bf16.mxu0 %v1108
        %1307 = vmatmul.mubr.bf16.gmra.mxu0 %v1107
        %v1308 = vpop.f32.mrf.mxu0
        %v1309 = vadd.f32 %v1152, %v1308
        %v1310 = vpop.f32.mrf.mxu0
        %v1311 = vpop.f32.mrf.mxu0
        %v1312 = vadd.f32 %v1152, %v1311
        %v1313 = vpop.f32.mrf.mxu0
        %1314 = vmatprep.mubr.bf16.mxu0 %v1110
        %1315 = vmatmul.mubr.bf16.gmra.mxu0 %v1109
        %v1316 = vpop.f32.mrf.mxu0
        %v1317 = vadd.f32 %v1152, %v1316
        %v1318 = vpop.f32.mrf.mxu0
        %v1319 = vpop.f32.mrf.mxu0
        %v1320 = vadd.f32 %v1152, %v1319
        %v1321 = vpop.f32.mrf.mxu0
        %1322 = vmatprep.mubr.bf16.mxu0 %v1112
        %1323 = vmatmul.mubr.bf16.gmra.mxu0 %v1111
        %v1324 = vpop.f32.mrf.mxu0
        %v1325 = vadd.f32 %v1152, %v1324
        %v1326 = vpop.f32.mrf.mxu0
        %v1327 = vpop.f32.mrf.mxu0
        %v1328 = vadd.f32 %v1152, %v1327
        %v1329 = vpop.f32.mrf.mxu0
        %1330 = vmatprep.mubr.bf16.mxu0 %v1114
        %1331 = vmatmul.mubr.bf16.gmra.mxu0 %v1113
        %v1332 = vpop.f32.mrf.mxu0
        %v1333 = vadd.f32 %v1152, %v1332
        %v1334 = vpop.f32.mrf.mxu0
        %v1335 = vpop.f32.mrf.mxu0
        %v1336 = vpop.f32.mrf.mxu0
        %1337 = vdwg.mxu0
        %1338 = vst [vmem:[%s341] sm:$0xff] %v1285
        %1339 = vst [vmem:[%s341 + $0x8] sm:$0xff] %v1288
        %1340 = vst [vmem:[%s341 + $0x10] sm:$0xff] %v1293
        %1341 = vst [vmem:[%s341 + $0x18] sm:$0xff] %v1296
        %1342 = vst [vmem:[%s341 + $0x20] sm:$0xff] %v1301
        %1343 = vst [vmem:[%s341 + $0x28] sm:$0xff] %v1304
        %1344 = vst [vmem:[%s341 + $0x30] sm:$0xff] %v1309
        %1345 = vst [vmem:[%s341 + $0x38] sm:$0xff] %v1312
        %1346 = vst [vmem:[%s341 + $0x40] sm:$0xff] %v1317
        %1347 = vst [vmem:[%s341 + $0x48] sm:$0xff] %v1320
        %1348 = vst [vmem:[%s341 + $0x50] sm:$0xff] %v1325
        %1349 = vst [vmem:[%s341 + $0x58] sm:$0xff] %v1328
        %1350 = vst [vmem:[%s341 + $0x60] sm:$0xff] %v1333
        %s1351 = sand.u32 %s186, 1
        %s1352 = scalar_lea.sflag [#allocation4], %s1351
        %s1353 = sand.u32 %s186, 1
        %s1354 = smul.addr %s1353, 104
        %s1355 = scalar_lea.vmem [#allocation10], %s1354
        // Predicated region
        $region65: #{tpu_custom_call.1} parent=47 // pred_check
          %p1356 = pneg %p196
        $region66: #{tpu_custom_call.1} parent=47 // pred_check_branch
          %1358 = sbr.rel (%p1356) target = $region68
        $region67: #{tpu_custom_call.1} parent=47 // pred_region
          %s1359 = smul.u32 13, %s26
          %s1361 = ssub.s32 1664, 1664
          %1362 = vsyncadd %s1352, %s1361
          %s1363 = smul.addr %s1359, 128
          %s1364 = scalar_lea.hbm %s7, %s1363
          %s1365 = sshll.u32 %s1355, 4
          %s1366 = int_to_ptr.vmem [resolvable:$true] %s1365
          %1371 = dma.vmem_to_hbm [thread:$0]  %s1366, 1664, %s1364, %s1352, 128, 128, 8
        $region68: #{tpu_custom_call.1} parent=47 // pred_fallthru
          _
      $region48: #{tpu_custom_call.1} parent=5 // pred_fallthru
        _
      %p1372 = scmp.le.s32.totalorder 2, %s21
      // Predicated region
      $region69: #{tpu_custom_call.1} parent=5 // pred_check
        %p1373 = pneg %p1372
      $region70: #{tpu_custom_call.1} parent=5 // pred_check_branch
        %1375 = sbr.rel (%p1373) target = $region72
      $region71: #{tpu_custom_call.1} parent=5 // pred_region
        %s1376 = ssub.s32 %s21, 2
        // Predicated region
        $region73: #{tpu_custom_call.1} parent=71 // pred_check
          %p1377 = pneg %p202
        $region74: #{tpu_custom_call.1} parent=71 // pred_check_branch
          %1379 = sbr.rel (%p1377) target = $region76
        $region75: #{tpu_custom_call.1} parent=71 // pred_region
          %s1380 = sand.u32 %s187, 1
          %s1381 = scalar_lea.sflag [#allocation4], %s1380
          %s1382 = sand.u32 %s187, 1
          %s1383 = smul.addr %s1382, 104
          %s1384 = scalar_lea.vmem [#allocation10], %s1383
          %1385 = dma.done %s1381, 1664
        $region76: #{tpu_custom_call.1} parent=71 // pred_fallthru
          _
      $region72: #{tpu_custom_call.1} parent=5 // pred_fallthru
        _
    $region6: #{tpu_custom_call.1} parent=1 // loop_footer
      %s25 = sadd.s32 1, %s21
    $region7: #{tpu_custom_call.1} parent=1 // loop_footer_branch
      %20 = sbr.rel target = $region3
    $region8: #{tpu_custom_call.1} parent=1 // loop_exit
      _
    %1386 = vsyncpa [#allocation3], 1
    %s1387 = scalar_lea.sflag [#allocation3], 1
    %1388 = vsyncpa %s1387, 1
    %1389 = vsyncpa [#allocation6], 1
    %1390 = vsyncpa [#allocation9], 1
    %1391 = vsyncpa [#allocation4], 1
    %s1392 = scalar_lea.sflag [#allocation4], 1
    %1393 = vsyncpa %s1392, 1

</llo_original>
